<compile_context>
chip_gen: v7x
topology: tpu7x:2x2x1
jax: 0.10.0
libtpu: 0.0.40
codegen_flags: <defaults>
</compile_context>

<pallas_src>
import jax
import jax.numpy as jnp
from jax.experimental import pallas as pl
from jax.experimental.pallas import tpu as pltpu

_LANE = 128
_BLOCK_BUDGET = 2 * 1024 * 1024      # soft per-block VMEM budget (bytes)
_VMEM_LIMIT = 32 * 1024 * 1024       # explicit scoped-VMEM limit (valid on v5e/v6e/v7x)


def _sublane(dtype):
    # second-to-last block dim must be a multiple of this (f32: 8, bf16: 16, i8: 32)
    return {4: 8, 2: 16, 1: 32}.get(jnp.dtype(dtype).itemsize, 8)


def _pick_tile(total, quantum, bytes_per_unit, budget):
    """Largest divisor of `total` that is a multiple of `quantum` and fits budget."""
    if total % quantum != 0:
        return total
    best = quantum
    for t in range(quantum, total + 1, quantum):
        if total % t == 0 and t * bytes_per_unit <= budget:
            best = t
    return best


def _pick_batch_tile(batch, bytes_per_batch, budget):
    best = 1
    for t in range(1, batch + 1):
        if batch % t == 0 and t * bytes_per_batch <= budget:
            best = t
    return best


# ---------------------------------------------------------------------------
# Path A: lane-aligned shapes (W % 128 == 0, H % sublane == 0).
# The 4x4 channel->spatial scatter is expressed entirely in the BlockSpec
# index_maps, so the kernel is a plain rectangular HBM<->VMEM copy:
# no XLU rotates, no masked vst — pure DMA relayout at HBM roofline.
# ---------------------------------------------------------------------------
def _copy_kernel(e_ref, o_ref):
    o_ref[...] = e_ref[...]


def _merge_dma(e):
    B, C, H, W = e.shape
    itemsize = jnp.dtype(e.dtype).itemsize
    h_t = _pick_tile(H, _sublane(e.dtype), W * itemsize, _BLOCK_BUDGET)
    n_h = H // h_t
    grid = (B, 4, 4, n_h)
    return pl.pallas_call(
        _copy_kernel,
        out_shape=jax.ShapeDtypeStruct((B, 1, 4 * H, 4 * W), e.dtype),
        grid_spec=pl.GridSpec(
            grid=grid,
            in_specs=[pl.BlockSpec(
                (1, 1, h_t, W), lambda b, r, c, h: (b, 4 * r + c, h, 0))],
            out_specs=pl.BlockSpec(
                (1, 1, h_t, W), lambda b, r, c, h: (b, 0, r * n_h + h, c)),
        ),
        compiler_params=pltpu.CompilerParams(
            dimension_semantics=("parallel",) * 4,
            vmem_limit_bytes=_VMEM_LIMIT),
        cost_estimate=pl.CostEstimate(
            flops=0, transcendentals=0,
            bytes_accessed=2 * B * C * H * W * itemsize),
    )(e)


# ---------------------------------------------------------------------------
# Path B: general shapes (e.g. the W=16 test). Each grid step assembles one
# (H_t, 4W) row strip per channel group with a single lane-concatenate and one
# dense store into a (B, 4, H, 4W) slab; the final (B, 1, 4H, 4W) view is a
# free contiguous reshape done outside the kernel. Batches are grouped per
# step so tiny spatial sizes still move a reasonable amount of data per step.
# ---------------------------------------------------------------------------
def _strip_kernel(e_ref, o_ref):
    # e_ref: (B_t, 4, H_t, W)  ->  o_ref: (B_t, 1, H_t, 4W)
    o_ref[:, 0, :, :] = jnp.concatenate(
        [e_ref[:, c, :, :] for c in range(4)], axis=-1)


def _merge_strip(e):
    B, C, H, W = e.shape
    itemsize = jnp.dtype(e.dtype).itemsize
    sub = _sublane(e.dtype)
    h_t = _pick_tile(H, sub, 4 * W * itemsize, _BLOCK_BUDGET) if H % sub == 0 else H
    n_h = H // h_t
    b_t = _pick_batch_tile(B, 4 * h_t * W * itemsize, _BLOCK_BUDGET)
    grid = (B // b_t, 4, n_h)
    strips = pl.pallas_call(
        _strip_kernel,
        out_shape=jax.ShapeDtypeStruct((B, 4, H, 4 * W), e.dtype),
        grid_spec=pl.GridSpec(
            grid=grid,
            in_specs=[pl.BlockSpec(
                (b_t, 4, h_t, W), lambda b, r, h: (b, r, h, 0))],
            out_specs=pl.BlockSpec(
                (b_t, 1, h_t, 4 * W), lambda b, r, h: (b, r, h, 0)),
        ),
        compiler_params=pltpu.CompilerParams(
            dimension_semantics=("parallel",) * 3,
            vmem_limit_bytes=_VMEM_LIMIT),
        cost_estimate=pl.CostEstimate(
            flops=0, transcendentals=0,
            bytes_accessed=2 * B * C * H * W * itemsize),
    )(e)
    # (B, 4, H, 4W) -> (B, 1, 4H, 4W): row-major contiguous, no data movement.
    return strips.reshape(B, 1, 4 * H, 4 * W)


def merge(e):
    B, C, H, W = e.shape
    assert C == 16, "Merge expects 16 channels (4x4 patch grid)"
    if W % _LANE == 0 and H % _sublane(e.dtype) == 0:
        return _merge_dma(e)
    # TODO(synk): for tiny spatial dims (W << 128) a plain XLA reshape/transpose
    # (depth-to-space) or fusion into the producer would beat any standalone kernel.
    return _merge_strip(e)


def merge_ref(e):
    # pure-JAX reference mirroring the PyTorch forward
    patches = []
    for start, end in ((0, 4), (4, 8), (8, 12), (12, 16)):
        patch = [e[:, i, :, :] for i in range(start, end)]
        patches.append(jnp.concatenate(patch, axis=-1))
    img = jnp.concatenate(patches, axis=1)
    return img[:, None, :, :]


if __name__ == "__main__":
    key = jax.random.PRNGKey(0)
    k1, k2 = jax.random.split(key)

    # Small NCHW test (general strip path: W not lane-aligned).
    B, C, H, W = 2, 16, 16, 16
    e = jax.random.normal(k1, (B, C, H, W), dtype=jnp.float32)
    out = jax.block_until_ready(merge(e))
    ref = merge_ref(e)
    assert out.shape == (B, 1, 4 * H, 4 * W)
    assert jnp.allclose(out, ref), "strip-path mismatch vs reference"

    # Lane-aligned test (pure DMA relayout path).
    B2, H2, W2 = 2, 8, 128
    e2 = jax.random.normal(k2, (B2, 16, H2, W2), dtype=jnp.float32)
    out2 = jax.block_until_ready(merge(e2))
    ref2 = merge_ref(e2)
    assert out2.shape == (B2, 1, 4 * H2, 4 * W2)
    assert jnp.allclose(out2, ref2), "dma-path mismatch vs reference"

    print("KERNEL_OK")
</pallas_src>

<mosaic_0001>
module attributes {stable_mosaic.version = 11 : i64} {
  func.func @_strip_kernel(%arg0: i32, %arg1: i32, %arg2: i32, %arg3: memref<2x4x16x16xf32, #tpu.memory_space<vmem>>, %arg4: memref<2x1x16x64xf32, #tpu.memory_space<vmem>>) attributes {dimension_semantics = [#tpu.dimension_semantics<parallel>, #tpu.dimension_semantics<parallel>, #tpu.dimension_semantics<parallel>], iteration_bounds = array<i64: 1, 4, 1>, scalar_prefetch = 0 : i64, scratch_operands = 0 : i64, tpu.core_type = #tpu.core_type<tc>, window_params = [{transform_indices = @transform_0, window_bounds = array<i64: 2, 4, 16, 16>}, {transform_indices = @transform_1, window_bounds = array<i64: 2, 1, 16, 64>}]} {
    %c0 = arith.constant 0 : index
    %c0_0 = arith.constant 0 : index
    %c0_1 = arith.constant 0 : index
    %c0_2 = arith.constant 0 : index
    %0 = vector.load %arg3[%c0, %c0_0, %c0_1, %c0_2] : memref<2x4x16x16xf32, #tpu.memory_space<vmem>>, vector<2x1x16x16xf32>
    %1 = vector.shape_cast %0 : vector<2x1x16x16xf32> to vector<2x16x16xf32>
    %c0_3 = arith.constant 0 : index
    %c1 = arith.constant 1 : index
    %c0_4 = arith.constant 0 : index
    %c0_5 = arith.constant 0 : index
    %2 = vector.load %arg3[%c0_3, %c1, %c0_4, %c0_5] : memref<2x4x16x16xf32, #tpu.memory_space<vmem>>, vector<2x1x16x16xf32>
    %3 = vector.shape_cast %2 : vector<2x1x16x16xf32> to vector<2x16x16xf32>
    %c0_6 = arith.constant 0 : index
    %c2 = arith.constant 2 : index
    %c0_7 = arith.constant 0 : index
    %c0_8 = arith.constant 0 : index
    %4 = vector.load %arg3[%c0_6, %c2, %c0_7, %c0_8] : memref<2x4x16x16xf32, #tpu.memory_space<vmem>>, vector<2x1x16x16xf32>
    %5 = vector.shape_cast %4 : vector<2x1x16x16xf32> to vector<2x16x16xf32>
    %c0_9 = arith.constant 0 : index
    %c3 = arith.constant 3 : index
    %c0_10 = arith.constant 0 : index
    %c0_11 = arith.constant 0 : index
    %6 = vector.load %arg3[%c0_9, %c3, %c0_10, %c0_11] : memref<2x4x16x16xf32, #tpu.memory_space<vmem>>, vector<2x1x16x16xf32>
    %7 = vector.shape_cast %6 : vector<2x1x16x16xf32> to vector<2x16x16xf32>
    %8 = tpu.concatenate %1, %3, %5, %7 in 2 : vector<2x16x16xf32>, vector<2x16x16xf32>, vector<2x16x16xf32>, vector<2x16x16xf32> -> vector<2x16x64xf32>
    %c0_12 = arith.constant 0 : index
    %c0_13 = arith.constant 0 : index
    %c0_14 = arith.constant 0 : index
    %c0_15 = arith.constant 0 : index
    %9 = vector.load %arg4[%c0_12, %c0_13, %c0_14, %c0_15] : memref<2x1x16x64xf32, #tpu.memory_space<vmem>>, vector<2x1x16x64xf32>
    %10 = vector.shape_cast %9 : vector<2x1x16x64xf32> to vector<2x16x64xf32>
    %11 = vector.shape_cast %8 : vector<2x16x64xf32> to vector<2x1x16x64xf32>
    tpu.vector_store %arg4[%c0_12, %c0_13, %c0_14, %c0_15], %11 {strides = array<i32>} : memref<2x1x16x64xf32, #tpu.memory_space<vmem>>, vector<2x1x16x64xf32>,
    return
  }
  func.func @transform_0(%arg0: i32, %arg1: i32, %arg2: i32) -> (i32, i32, i32, i32) {
    %c0_i32 = arith.constant 0 : i32
    %c0_i32_0 = arith.constant 0 : i32
    return %arg0, %arg1, %arg2, %c0_i32 : i32, i32, i32, i32
  }
  func.func @transform_1(%arg0: i32, %arg1: i32, %arg2: i32) -> (i32, i32, i32, i32) {
    %c0_i32 = arith.constant 0 : i32
    %c0_i32_0 = arith.constant 0 : i32
    return %arg0, %arg1, %arg2, %c0_i32 : i32, i32, i32, i32
  }
}

</mosaic_0001>

<llo_original>
// kernel: tpu_custom_call.1
$region0: #{tpu_custom_call.1}
  #allocation0 [shape = 'u32[]', space=smem, size = 0x4, offset = 0x4, fixed_abs, tag = 'smem constant byte address 0x4 - core index']
  #allocation1 [shape = 'u32[144,128]{1,0:T(1,128)}', space=vmem, size = 0x12000, scoped, tag = 'internal scratch']
  #allocation6 [shape = 's32[]', space=sflag, size = 0x4, offset = 0, fixed_abs, tag = 'sflag constant byte address 0x0 - dummy sync flag']
  #allocation8 [shape = 's32[]', space=sflag, size = 0x4, offset = 0, fixed_abs, tag = 'sflag constant byte address 0x0 - dummy sync flag']
  %s0 = inlined_call_operand.hbm [shape: f32[2,16,16,16], index: 0, kind: input, shape index: {}]
  %s1 = inlined_call_operand.hbm [shape: f32[2,4,16,64], index: 1, kind: output, shape index: {}]
  %s2 = sld [smem:[#allocation0]]
  $region41: #{tpu_custom_call.1} parent=0
    _
  %s4 = ssub.s32 1, %s2
  %s5 = scalar_select 0, %s4, %s2
  $region1: #{tpu_custom_call.1} parent=0
    #allocation2 [shape = 'u8[131072]{0}', space=vmem, size = 0x20000, scoped, tag = 'input window, operand 0']
    #allocation3 [shape = 's32[2]{0}', space=sflag, size = 0x8, scoped, tag = 'scoped memory for tpu_custom_call.1']
    #allocation4 [shape = 's32[2]{0}', space=sflag, size = 0x8, scoped, tag = 'scoped memory for tpu_custom_call.1']
    #allocation5 [shape = 'u8[32768]{0}', space=vmem, size = 0x8000, scoped, tag = 'output window, operand 0']
    %6 = vsyncpa [#allocation3], 0
    %s7 = scalar_lea.sflag [#allocation3], 1
    %8 = vsyncpa %s7, 0
    %9 = vsyncpa [#allocation4], 0
    %s10 = scalar_lea.sflag [#allocation4], 1
    %11 = vsyncpa %s10, 0
    loop: start=0, step=1, limit=6
    $region2: #{tpu_custom_call.1} parent=1 // loop_pre_header
      _
    $region3: #{tpu_custom_call.1} parent=1 // loop_header
      %s13 = sphi 0, %s17
      %p14 = scmp.ge.s32.totalorder %s13, 6
      %s20 = sphi 0, %s39
      %s21 = sphi 0, %s35
      %s22 = sphi 0, %s31
      %s23 = sphi 0, %s20
      %s24 = sphi 0, %s21
      %s25 = sphi 0, %s22
      %s26 = sphi 0, %s23
      %s27 = sphi 0, %s24
      %s28 = sphi 0, %s25
      %s46 = sphi 0, %s48
      %s49 = sphi 0, %s46
      %s50 = sphi 0, %s49
      %s66 = sphi 0, %s50
      %s76 = sphi 0, %s78
      %s79 = sphi 0, %s76
      %s80 = sphi 0, %s79
      %s96 = sphi 0, %s80
    $region4: #{tpu_custom_call.1} parent=1 // loop_header_branch
      %16 = sbr.rel (%p14) target = $region8
    $region5: #{tpu_custom_call.1} parent=1 // loop_body
      %s18 = ssub.s32 %s13, 1
      %s19 = ssub.s32 %s13, 2
      %s29 = sadd.s32 1, %s22
      %p30 = scmp.ge.s32.totalorder %s29, 1
      %s31 = scalar_select %p30, 0, %s29
      %s32 = sadd.s32 1, %s21
      %s33 = scalar_select %p30, %s32, %s21
      %p34 = scmp.ge.s32.totalorder %s33, 4
      %s35 = scalar_select %p34, 0, %s33
      %s36 = sadd.s32 1, %s20
      %s37 = scalar_select %p34, %s36, %s20
      %p38 = scmp.ge.s32.totalorder %s37, 1
      %s39 = scalar_select %p38, 0, %s37
      %s40 = ssub.s32 %s20, %s39
      %s41 = ssub.s32 %s21, %s35
      %s42 = sor.u32 %s40, %s41
      %s43 = ssub.s32 %s22, %s31
      %s44 = sor.u32 %s42, %s43
      %p45 = scmp.eq.s32.totalorder %s44, 0
      %s47 = sadd.s32 %s46, 1
      %s48 = scalar_select %p45, %s46, %s47
      %p51 = pneg %p45
      %p52 = scmp.eq.s32.totalorder %s13, 3
      %p53 = por %p51, %p52
      %p54 = scmp.ne.s32.totalorder %s46, %s49
      %p55 = scmp.eq.s32.totalorder %s13, 0
      %p56 = por %p54, %p55
      %p57 = scmp.ne.s32.totalorder %s46, %s49
      %p58 = scmp.eq.s32.totalorder %s18, 3
      %p59 = por %p57, %p58
      %p60 = scmp.ne.s32.totalorder %s49, %s50
      %p61 = scmp.eq.s32.totalorder %s18, 0
      %p62 = por %p60, %p61
      %p63 = scmp.ne.s32.totalorder %s49, %s50
      %p64 = scmp.eq.s32.totalorder %s19, 3
      %p65 = por %p63, %p64
      %p67 = scmp.ne.s32.totalorder %s50, %s66
      %p68 = scmp.eq.s32.totalorder %s19, 0
      %p69 = por %p67, %p68
      %s70 = ssub.s32 %s20, %s39
      %s71 = ssub.s32 %s21, %s35
      %s72 = sor.u32 %s70, %s71
      %s73 = ssub.s32 %s22, %s31
      %s74 = sor.u32 %s72, %s73
      %p75 = scmp.eq.s32.totalorder %s74, 0
      %s77 = sadd.s32 %s76, 1
      %s78 = scalar_select %p75, %s76, %s77
      %p81 = pneg %p75
      %p82 = scmp.eq.s32.totalorder %s13, 3
      %p83 = por %p81, %p82
      %p84 = scmp.ne.s32.totalorder %s76, %s79
      %p85 = scmp.eq.s32.totalorder %s13, 0
      %p86 = por %p84, %p85
      %p87 = scmp.ne.s32.totalorder %s76, %s79
      %p88 = scmp.eq.s32.totalorder %s18, 3
      %p89 = por %p87, %p88
      %p90 = scmp.ne.s32.totalorder %s79, %s80
      %p91 = scmp.eq.s32.totalorder %s18, 0
      %p92 = por %p90, %p91
      %p93 = scmp.ne.s32.totalorder %s79, %s80
      %p94 = scmp.eq.s32.totalorder %s19, 3
      %p95 = por %p93, %p94
      %p97 = scmp.ne.s32.totalorder %s80, %s96
      %p98 = scmp.eq.s32.totalorder %s19, 0
      %p99 = por %p97, %p98
      %p100 = scmp.le.s32.totalorder 1, %s13
      %p101 = scmp.lt.s32.totalorder %s13, 5
      %p102 = pnand %p100, %p101
      %p103 = pneg %p102
      // Predicated region
      $region9: #{tpu_custom_call.1} parent=5 // pred_check
        _
      $region10: #{tpu_custom_call.1} parent=5 // pred_check_branch
        %105 = sbr.rel (%p102) target = $region12
      $region11: #{tpu_custom_call.1} parent=5 // pred_region
        %s106 = ssub.s32 %s13, 1
      $region12: #{tpu_custom_call.1} parent=5 // pred_fallthru
        _
      %p107 = scmp.lt.s32.totalorder %s13, 4
      // Predicated region
      $region13: #{tpu_custom_call.1} parent=5 // pred_check
        %p108 = pneg %p107
      $region14: #{tpu_custom_call.1} parent=5 // pred_check_branch
        %110 = sbr.rel (%p108) target = $region16
      $region15: #{tpu_custom_call.1} parent=5 // pred_region
        // Predicated region
        $region17: #{tpu_custom_call.1} parent=15 // pred_check
          %p111 = pneg %p56
        $region18: #{tpu_custom_call.1} parent=15 // pred_check_branch
          %113 = sbr.rel (%p111) target = $region20
        $region19: #{tpu_custom_call.1} parent=15 // pred_region
          #allocation7 [shape = 'u32[6]{0}', space=smem, size = 0x18, scoped, tag = 'DMA stride descriptor']
          %s114 = sand.u32 %s46, 1
          %s115 = scalar_lea.sflag [#allocation3], %s114
          %s116 = sand.u32 %s46, 1
          %s117 = smul.addr %s116, 128
          %s118 = scalar_lea.vmem [#allocation2], %s117
          %s119 = smul.u32 2, %s20
          %s120 = smul.u32 4, %s21
          %s121 = smul.u32 2, %s22
          %s123 = ssub.s32 2048, 2048
          %124 = vsyncadd %s115, %s123
          %s125 = smul.addr %s120, 2
          %s126 = sadd.s32 %s121, %s125
          %s127 = smul.addr %s119, 32
          %s128 = sadd.s32 %s126, %s127
          %s129 = smul.addr %s128, 128
          %s130 = scalar_lea.hbm %s0, %s129
          %s132 = sshll.u32 1, 14
          %s133 = sxor.u32 4294967295, %s132
          %s135 = sld [smem:[#allocation0]]
          %s136 = sadd.s32 2, %s135
          %s138 = sshll.u32 7, 26
          %s139 = sxor.u32 4294967295, %s138
          %s140 = sand.u32 0, %s139
          %s141 = sshll.u32 %s136, 26
          %s142 = sor.u32 %s140, %s141
          %s143 = sshll.u32 %s118, 4
          %s144 = int_to_ptr.vmem [resolvable:$true] %s143
          %150 = sst [smem:[#allocation7]] 4096
          %s151 = scalar_lea.smem [#allocation7], 1
          %152 = sst [smem:[%s151]] 1024
          %s153 = scalar_lea.smem [#allocation7], 2
          %154 = sst [smem:[%s153]] 8
          %s155 = scalar_lea.smem [#allocation7], 3
          %156 = sst [smem:[%s155]] 128
          %s157 = scalar_lea.smem [#allocation7], 4
          %158 = sst [smem:[%s157]] 128
          %s159 = scalar_lea.smem [#allocation7], 5
          %160 = sst [smem:[%s159]] 8
          %162 = dma.general %s130, 2048, %s144, %s115, [#allocation6], [#allocation7], %s142, 0
        $region20: #{tpu_custom_call.1} parent=15 // pred_fallthru
          _
      $region16: #{tpu_custom_call.1} parent=5 // pred_fallthru
        _
      %p163 = scmp.le.s32.totalorder 1, %s13
      %p164 = scmp.lt.s32.totalorder %s13, 5
      %p165 = pnand %p163, %p164
      %p166 = pneg %p165
      // Predicated region
      $region21: #{tpu_custom_call.1} parent=5 // pred_check
        _
      $region22: #{tpu_custom_call.1} parent=5 // pred_check_branch
        %168 = sbr.rel (%p165) target = $region24
      $region23: #{tpu_custom_call.1} parent=5 // pred_region
        %s169 = ssub.s32 %s13, 1
        %s170 = sand.u32 %s49, 1
        %s171 = scalar_lea.sflag [#allocation3], %s170
        %s172 = sand.u32 %s49, 1
        %s173 = smul.addr %s172, 128
        %s174 = scalar_lea.vmem [#allocation2], %s173
        // Predicated region
        $region25: #{tpu_custom_call.1} parent=23 // pred_check
          %p175 = pneg %p62
        $region26: #{tpu_custom_call.1} parent=23 // pred_check_branch
          %177 = sbr.rel (%p175) target = $region28
        $region27: #{tpu_custom_call.1} parent=23 // pred_region
          %178 = dma.done %s171, 2048
        $region28: #{tpu_custom_call.1} parent=23 // pred_fallthru
          _
        %s179 = sand.u32 %s49, 1
        %s180 = scalar_lea.sflag [#allocation3], %s179
        %s181 = sand.u32 %s49, 1
        %s182 = smul.addr %s181, 128
        %s183 = scalar_lea.vmem [#allocation2], %s182
        %p184 = pneg %p62
        %p185 = pneg %p59
        %p186 = pneg %p92
        %p187 = pneg %p89
        %s188 = sand.u32 %s79, 1
        %s189 = scalar_lea.sflag [#allocation4], %s188
        %s190 = sand.u32 %s79, 1
        %s191 = smul.addr %s190, 32
        %s192 = scalar_lea.vmem [#allocation5], %s191
        %s193 = smul.u32 2, %s23
        %s194 = smul.u32 4, %s24
        %s195 = smul.u32 2, %s25
        %s196 = smul.u32 2, %s23
        %s197 = smul.u32 2, %s25
        %v198 = vld [vmem:[%s174] sm:$0xff]
        %v199 = vld [vmem:[%s174 + $0x8] sm:$0xff]
        %v200 = vld [vmem:[%s174 + $0x40] sm:$0xff]
        %v201 = vld [vmem:[%s174 + $0x48] sm:$0xff]
        %s202 = scalar_lea.vmem %s174, 16 [#allocation2]
        %v203 = vld [vmem:[%s202] sm:$0xff]
        %v204 = vld [vmem:[%s202 + $0x8] sm:$0xff]
        %v205 = vld [vmem:[%s202 + $0x40] sm:$0xff]
        %v206 = vld [vmem:[%s202 + $0x48] sm:$0xff]
        %s207 = scalar_lea.vmem %s174, 32 [#allocation2]
        %v208 = vld [vmem:[%s207] sm:$0xff]
        %v209 = vld [vmem:[%s207 + $0x8] sm:$0xff]
        %v210 = vld [vmem:[%s207 + $0x40] sm:$0xff]
        %v211 = vld [vmem:[%s207 + $0x48] sm:$0xff]
        %s212 = scalar_lea.vmem %s174, 48 [#allocation2]
        %v213 = vld [vmem:[%s212] sm:$0xff]
        %v214 = vld [vmem:[%s212 + $0x8] sm:$0xff]
        %v215 = vld [vmem:[%s212 + $0x40] sm:$0xff]
        %v216 = vld [vmem:[%s212 + $0x48] sm:$0xff]
        %221 = vrot.lane.b32.xlu0 %v203, 16
        %v222 = vpop.permute.xlu0 %221
        %223 = vrot.lane.b32.xlu0 %v204, 16
        %v224 = vpop.permute.xlu0 %223
        %225 = vrot.lane.b32.xlu0 %v205, 16
        %v226 = vpop.permute.xlu0 %225
        %227 = vrot.lane.b32.xlu0 %v206, 16
        %v228 = vpop.permute.xlu0 %227
        %237 = vrot.lane.b32.xlu0 %v208, 32
        %v238 = vpop.permute.xlu0 %237
        %239 = vrot.lane.b32.xlu0 %v209, 32
        %v240 = vpop.permute.xlu0 %239
        %241 = vrot.lane.b32.xlu0 %v210, 32
        %v242 = vpop.permute.xlu0 %241
        %243 = vrot.lane.b32.xlu0 %v211, 32
        %v244 = vpop.permute.xlu0 %243
        %253 = vrot.lane.b32.xlu0 %v213, 48
        %v254 = vpop.permute.xlu0 %253
        %255 = vrot.lane.b32.xlu0 %v214, 48
        %v256 = vpop.permute.xlu0 %255
        %257 = vrot.lane.b32.xlu0 %v215, 48
        %v258 = vpop.permute.xlu0 %257
        %259 = vrot.lane.b32.xlu0 %v216, 48
        %v260 = vpop.permute.xlu0 %259
        %vm265 = vcmask 130048
        %v266 = vsel %vm265, %v198, %v222
        %v267 = vsel %vm265, %v199, %v224
        %v268 = vsel %vm265, %v200, %v226
        %v269 = vsel %vm265, %v201, %v228
        %vm270 = vcmask 261120
        %v271 = vsel %vm270, %v266, %v238
        %v272 = vsel %vm270, %v267, %v240
        %v273 = vsel %vm270, %v268, %v242
        %v274 = vsel %vm270, %v269, %v244
        %vm275 = vcmask 392192
        %v276 = vsel %vm275, %v271, %v254
        %v277 = vsel %vm275, %v272, %v256
        %v278 = vsel %vm275, %v273, %v258
        %v279 = vsel %vm275, %v274, %v260
        %vm280 = vcmask 523264
        %281 = vst.msk [vmem:[%s192] sm:$0xff] %vm280, %v276
        %282 = vst.msk [vmem:[%s192 + $0x8] sm:$0xff] %vm280, %v277
        %283 = vst.msk [vmem:[%s192 + $0x10] sm:$0xff] %vm280, %v278
        %284 = vst.msk [vmem:[%s192 + $0x18] sm:$0xff] %vm280, %v279
        %s285 = sand.u32 %s79, 1
        %s286 = scalar_lea.sflag [#allocation4], %s285
        %s287 = sand.u32 %s79, 1
        %s288 = smul.addr %s287, 32
        %s289 = scalar_lea.vmem [#allocation5], %s288
        // Predicated region
        $region29: #{tpu_custom_call.1} parent=23 // pred_check
          %p290 = pneg %p89
        $region30: #{tpu_custom_call.1} parent=23 // pred_check_branch
          %292 = sbr.rel (%p290) target = $region32
        $region31: #{tpu_custom_call.1} parent=23 // pred_region
          #allocation9 [shape = 'u32[6]{0}', space=smem, size = 0x18, scoped, tag = 'DMA stride descriptor']
          %s293 = smul.u32 2, %s23
          %s294 = smul.u32 2, %s25
          %s296 = ssub.s32 512, 512
          %297 = vsyncadd %s286, %s296
          %s298 = smul.addr %s24, 2
          %s299 = sadd.s32 %s294, %s298
          %s300 = smul.addr %s293, 8
          %s301 = sadd.s32 %s299, %s300
          %s302 = smul.addr %s301, 128
          %s303 = scalar_lea.hbm %s1, %s302
          %s305 = sshll.u32 1, 14
          %s306 = sxor.u32 4294967295, %s305
          %s309 = sshll.u32 7, 18
          %s310 = sxor.u32 4294967295, %s309
          %s311 = sand.u32 0, %s310
          %s313 = sor.u32 %s311, 0
          %s315 = sshll.u32 3, 24
          %s316 = sxor.u32 4294967295, %s315
          %s317 = sand.u32 %s313, %s316
          %s319 = sor.u32 %s317, 0
          %s320 = sshll.u32 %s289, 4
          %s321 = int_to_ptr.vmem [resolvable:$true] %s320
          %327 = sst [smem:[#allocation9]] 256
          %s328 = scalar_lea.smem [#allocation9], 1
          %329 = sst [smem:[%s328]] 1024
          %s330 = scalar_lea.smem [#allocation9], 2
          %331 = sst [smem:[%s330]] 2
          %s332 = scalar_lea.smem [#allocation9], 3
          %333 = sst [smem:[%s332]] 128
          %s334 = scalar_lea.smem [#allocation9], 4
          %335 = sst [smem:[%s334]] 128
          %s336 = scalar_lea.smem [#allocation9], 5
          %337 = sst [smem:[%s336]] 8
          %339 = dma.general %s321, 512, %s303, %s286, [#allocation8], [#allocation9], %s319, 0
        $region32: #{tpu_custom_call.1} parent=23 // pred_fallthru
          _
      $region24: #{tpu_custom_call.1} parent=5 // pred_fallthru
        _
      %p340 = scmp.le.s32.totalorder 2, %s13
      // Predicated region
      $region33: #{tpu_custom_call.1} parent=5 // pred_check
        %p341 = pneg %p340
      $region34: #{tpu_custom_call.1} parent=5 // pred_check_branch
        %343 = sbr.rel (%p341) target = $region36
      $region35: #{tpu_custom_call.1} parent=5 // pred_region
        %s344 = ssub.s32 %s13, 2
        // Predicated region
        $region37: #{tpu_custom_call.1} parent=35 // pred_check
          %p345 = pneg %p95
        $region38: #{tpu_custom_call.1} parent=35 // pred_check_branch
          %347 = sbr.rel (%p345) target = $region40
        $region39: #{tpu_custom_call.1} parent=35 // pred_region
          %s348 = sand.u32 %s80, 1
          %s349 = scalar_lea.sflag [#allocation4], %s348
          %s350 = sand.u32 %s80, 1
          %s351 = smul.addr %s350, 32
          %s352 = scalar_lea.vmem [#allocation5], %s351
          %353 = dma.done %s349, 512
        $region40: #{tpu_custom_call.1} parent=35 // pred_fallthru
          _
      $region36: #{tpu_custom_call.1} parent=5 // pred_fallthru
        _
    $region6: #{tpu_custom_call.1} parent=1 // loop_footer
      %s17 = sadd.s32 1, %s13
    $region7: #{tpu_custom_call.1} parent=1 // loop_footer_branch
      %12 = sbr.rel target = $region3
    $region8: #{tpu_custom_call.1} parent=1 // loop_exit
      _
    %354 = vsyncpa [#allocation3], 1
    %s355 = scalar_lea.sflag [#allocation3], 1
    %356 = vsyncpa %s355, 1
    %357 = vsyncpa [#allocation4], 1
    %s358 = scalar_lea.sflag [#allocation4], 1
    %359 = vsyncpa %s358, 1

</llo_original>
